<compile_context>
chip_gen: v7x
topology: tpu7x:2x2x1
jax: 0.10.0
libtpu: 0.0.40
codegen_flags: <defaults>
</compile_context>

<pallas_src>
import functools

import jax
import jax.numpy as jnp
from jax import lax
from jax.experimental import pallas as pl
from jax.experimental.pallas import tpu as pltpu


_TARGET_BLOCK_BYTES = 4 * 1024 * 1024   # x block; x + y each double-buffered -> ~16 MiB live
_VMEM_LIMIT_BYTES = 32 * 1024 * 1024    # safe on v5e/v6e (128 MiB phys) and v7x (64 MiB phys)
# TODO(synk): per-generation tuning — v5e/v6e could take 8 MiB blocks / 64 MiB limit.


def _bn_fused_kernel(x_ref, w_ref, b_ref,
                     o_ref, scale_out_ref, bias_out_ref, mean_out_ref, var_out_ref,
                     sum_ref, sumsq_ref, scale_ref, bias_ref,
                     *, total_rows, row_block, count, eps):
    """Fused batchnorm stats + apply.

    grid = (2, T): axis 0 is the phase (0 = stats, 1 = apply), axis 1 tiles the
    leading (batch/row) axis of x. Per-channel accumulators and the finalized
    scale/bias live in VMEM scratch and persist across grid steps.
    """
    phase = pl.program_id(0)
    ti = pl.program_id(1)
    need_mask = (total_rows % row_block) != 0   # static python bool

    @pl.when(jnp.logical_and(phase == 0, ti == 0))
    def _init():
        sum_ref[...] = jnp.zeros_like(sum_ref)
        sumsq_ref[...] = jnp.zeros_like(sumsq_ref)

    @pl.when(phase == 0)
    def _stats():
        x = x_ref[...].astype(jnp.float32)
        if need_mask:   # zero the overhang rows of the last (cdiv) block
            row = ti * row_block + lax.broadcasted_iota(jnp.int32, x.shape, 0)
            x = jnp.where(row < total_rows, x, 0.0)
        if x.ndim == 3:     # (rows, C, HW): reduce lanes (XLU), then rows
            s = jnp.sum(jnp.sum(x, axis=2, keepdims=True), axis=0, keepdims=True)
            ss = jnp.sum(jnp.sum(x * x, axis=2, keepdims=True), axis=0, keepdims=True)
        else:               # (rows, C): reduce rows
            s = jnp.sum(x, axis=0, keepdims=True)
            ss = jnp.sum(x * x, axis=0, keepdims=True)
        sum_ref[...] += s
        sumsq_ref[...] += ss

    @pl.when(jnp.logical_and(phase == 1, ti == 0))
    def _finalize():
        mean = sum_ref[...] * (1.0 / count)
        # TODO(synk): naive sum-of-squares variance can cancel for |mean| >> std;
        # a two-pass (subtract-mean) variant would cost one extra read of x.
        var = (sumsq_ref[...] - count * mean * mean) / (count - 1.0)
        scale = w_ref[...] * lax.rsqrt(var + eps)      # EUP rsqrt, ~free slot
        bias_o = b_ref[...] - mean * scale
        scale_ref[...] = scale
        bias_ref[...] = bias_o
        scale_out_ref[...] = scale
        bias_out_ref[...] = bias_o
        mean_out_ref[...] = mean
        var_out_ref[...] = var

    @pl.when(phase == 1)
    def _apply():
        x = x_ref[...].astype(jnp.float32)
        # scale/bias are (1, C, 1) for the 3D path, (1, C) for the 2D path —
        # both broadcast directly against the x block (no in-kernel reshape).
        o_ref[...] = (x * scale_ref[...] + bias_ref[...]).astype(o_ref.dtype)


def _row_block_size(n_rows, bytes_per_row, sublane_align):
    tgt = max(1, _TARGET_BLOCK_BYTES // max(1, bytes_per_row))
    if tgt >= n_rows:
        return int(n_rows)
    if sublane_align > 1:
        tgt = max(sublane_align, (tgt // sublane_align) * sublane_align)
        if tgt >= n_rows:
            return int(n_rows)
    return int(tgt)


def _fused_bn(x_op, weight, bias, eps):
    """Run the fused kernel on x_op of shape (N, C, H*W) or (M, C)."""
    itemsize = jnp.dtype(x_op.dtype).itemsize
    if x_op.ndim == 3:
        n, c, hw = x_op.shape
        rb = _row_block_size(n, c * hw * itemsize, sublane_align=1)
        # TODO(synk): if one sample's (C, HW) slab is itself too big for VMEM,
        # the channel/spatial axes would also need tiling.
        grid = (2, pl.cdiv(n, rb))
        count = float(n) * float(hw)
        total_rows = n
        x_spec = pl.BlockSpec((rb, c, hw), lambda p, i: (i, 0, 0))
        # p*i: constant block 0 during the stats phase (never written back),
        # block i during the apply phase -> exactly one HBM write per y block.
        o_spec = pl.BlockSpec((rb, c, hw), lambda p, i: (p * i, 0, 0))
        small_shape = (1, c, 1)          # per-channel, broadcastable vs x blocks
        small_spec = pl.BlockSpec(small_shape, lambda p, i: (0, 0, 0))
    else:
        m, c = x_op.shape
        # 2D block: second-to-last dim (rows) must be a multiple of 8 unless full.
        rb = _row_block_size(m, c * itemsize, sublane_align=8)
        grid = (2, pl.cdiv(m, rb))
        count = float(m)
        total_rows = m
        x_spec = pl.BlockSpec((rb, c), lambda p, i: (i, 0))
        o_spec = pl.BlockSpec((rb, c), lambda p, i: (p * i, 0))
        small_shape = (1, c)
        small_spec = pl.BlockSpec(small_shape, lambda p, i: (0, 0))

    w2 = weight.astype(jnp.float32).reshape(small_shape)
    b2 = bias.astype(jnp.float32).reshape(small_shape)

    kernel = functools.partial(
        _bn_fused_kernel, total_rows=total_rows, row_block=rb,
        count=count, eps=float(eps))

    small_out = jax.ShapeDtypeStruct(small_shape, jnp.float32)
    y, scale, bias_o, mean, var = pl.pallas_call(
        kernel,
        out_shape=(jax.ShapeDtypeStruct(x_op.shape, x_op.dtype),
                   small_out, small_out, small_out, small_out),
        grid_spec=pltpu.PrefetchScalarGridSpec(
            num_scalar_prefetch=0,
            grid=grid,
            in_specs=[x_spec, small_spec, small_spec],
            out_specs=[o_spec, small_spec, small_spec, small_spec, small_spec],
            scratch_shapes=[pltpu.VMEM(small_shape, jnp.float32)] * 4,
        ),
        compiler_params=pltpu.CompilerParams(
            # Both axes are order-dependent (phase ordering, then the reduction
            # carry across row tiles).
            # TODO(synk): a v7x 2-TC split of the stats pass (leading "parallel"
            # axis + two partial accumulators) was traded for single-call fusion.
            dimension_semantics=("arbitrary", "arbitrary"),
            vmem_limit_bytes=_VMEM_LIMIT_BYTES,
        ),
    )(x_op, w2, b2)
    return y, scale, bias_o, mean, var


@functools.partial(jax.jit, static_argnames=("eps", "momentum"))
def _bn_forward(x, weight, bias, running_var, running_mean, *, eps, momentum):
    if x.ndim == 4:
        n, c, h, w = x.shape
        x3 = x.reshape(n, c, h * w)        # free reshape: native NCHW layout
        y3, scale, bias_o, mean, var = _fused_bn(x3, weight, bias, eps)
        y = y3.reshape(n, c, h, w)
    else:
        assert x.ndim == 2
        c = x.shape[1]
        y, scale, bias_o, mean, var = _fused_bn(x, weight, bias, eps)
    scale = scale.reshape(c)
    bias_o = bias_o.reshape(c)
    mean = mean.reshape(c)
    var = var.reshape(c)
    new_rv = running_var * momentum + var * (1.0 - momentum)
    new_rm = running_mean * momentum + mean * (1.0 - momentum)
    return y, scale, bias_o, new_rv, new_rm


class BatchNormStatsCallbakPallas:
    """JAX/Pallas port of BatchNormStatsCallbak (training forward path).

    Parameters initialized exactly as in the PyTorch __init__ (use_scalar_scale=False):
      running_var = zeros(dim), running_mean = zeros(dim),
      weight = ones(dim), bias = zeros(dim)
    forward() returns (out, scale, bias) — scale/bias are what the original
    module passes to owner.on_bn_internals.
    """

    def __init__(self, dim, momentum=0.9, eps=1e-5):
        self.dim = dim
        self.momentum = momentum
        self.eps = eps
        self.weight = jnp.ones((dim,), jnp.float32)
        self.bias = jnp.zeros((dim,), jnp.float32)
        self.running_var = jnp.zeros((dim,), jnp.float32)
        self.running_mean = jnp.zeros((dim,), jnp.float32)
        # TODO(synk): use_scalar_scale=True, AbstractTensor / MultiSampleTensor
        # input paths, the eval-with-running-stats branch and the
        # owner.on_bn_internals weakref callback are host-side plumbing.

    def forward(self, inp):
        y, scale, bias_o, new_rv, new_rm = _bn_forward(
            inp, self.weight, self.bias, self.running_var, self.running_mean,
            eps=self.eps, momentum=self.momentum)
        # torch: running_var.mul_(momentum).add_(var * (1 - momentum)) under no_grad
        self.running_var = new_rv
        self.running_mean = new_rm
        return y, scale, bias_o


if __name__ == "__main__":
    key = jax.random.PRNGKey(0)
    N, C, H, W = 2, 4, 16, 16
    x = jax.random.normal(key, (N, C, H, W), dtype=jnp.float32)

    bn = BatchNormStatsCallbakPallas(dim=C, momentum=0.9, eps=1e-5)
    out, scale, bias_o = bn.forward(x)
    out = jax.block_until_ready(out)

    # Reference check (plain JAX, mirrors the PyTorch math).
    mean_ref = jnp.mean(x, axis=(0, 2, 3))
    var_ref = jnp.var(x, axis=(0, 2, 3), ddof=1)
    scale_ref = bn.weight / jnp.sqrt(var_ref + bn.eps)
    bias_ref = bn.bias - mean_ref * scale_ref
    out_ref = x * scale_ref.reshape(1, C, 1, 1) + bias_ref.reshape(1, C, 1, 1)

    assert jnp.allclose(out, out_ref, atol=1e-4, rtol=1e-4), "4D output mismatch"
    assert jnp.allclose(scale, scale_ref, atol=1e-5, rtol=1e-5), "scale mismatch"
    assert jnp.allclose(bias_o, bias_ref, atol=1e-5, rtol=1e-5), "bias mismatch"
    assert jnp.allclose(bn.running_var, 0.1 * var_ref, atol=1e-5), "running_var mismatch"
    assert jnp.allclose(bn.running_mean, 0.1 * mean_ref, atol=1e-5), "running_mean mismatch"

    # 2D (fully-connected) path.
    M2, C2 = 8, 32
    x2 = jax.random.normal(jax.random.PRNGKey(1), (M2, C2), dtype=jnp.float32)
    bn2 = BatchNormStatsCallbakPallas(dim=C2)
    y2, s2, b2 = bn2.forward(x2)
    y2 = jax.block_until_ready(y2)
    mean2 = jnp.mean(x2, axis=0)
    var2 = jnp.var(x2, axis=0, ddof=1)
    s2_ref = bn2.weight / jnp.sqrt(var2 + bn2.eps)
    b2_ref = bn2.bias - mean2 * s2_ref
    y2_ref = x2 * s2_ref + b2_ref
    assert jnp.allclose(y2, y2_ref, atol=1e-4, rtol=1e-4), "2D output mismatch"

    print("KERNEL_OK")
</pallas_src>

<mosaic_0001>
module attributes {stable_mosaic.version = 11 : i64} {
  func.func @_bn_fused_kernel(%arg0: i32, %arg1: i32, %arg2: memref<2x4x256xf32, #tpu.memory_space<vmem>>, %arg3: memref<1x4x1xf32, #tpu.memory_space<vmem>>, %arg4: memref<1x4x1xf32, #tpu.memory_space<vmem>>, %arg5: memref<2x4x256xf32, #tpu.memory_space<vmem>>, %arg6: memref<1x4x1xf32, #tpu.memory_space<vmem>>, %arg7: memref<1x4x1xf32, #tpu.memory_space<vmem>>, %arg8: memref<1x4x1xf32, #tpu.memory_space<vmem>>, %arg9: memref<1x4x1xf32, #tpu.memory_space<vmem>>, %arg10: memref<1x4x1xf32, #tpu.memory_space<vmem>>, %arg11: memref<1x4x1xf32, #tpu.memory_space<vmem>>, %arg12: memref<1x4x1xf32, #tpu.memory_space<vmem>>, %arg13: memref<1x4x1xf32, #tpu.memory_space<vmem>>) attributes {dimension_semantics = [#tpu.dimension_semantics<arbitrary>, #tpu.dimension_semantics<arbitrary>], iteration_bounds = array<i64: 2, 1>, scalar_prefetch = 0 : i64, scratch_operands = 4 : i64, tpu.core_type = #tpu.core_type<tc>, window_params = [{transform_indices = @transform_0, window_bounds = array<i64: 2, 4, 256>}, {pipeline_mode = #tpu.pipeline_mode<synchronous>, transform_indices = @transform_1, window_bounds = array<i64: 1, 4, 1>}, {pipeline_mode = #tpu.pipeline_mode<synchronous>, transform_indices = @transform_2, window_bounds = array<i64: 1, 4, 1>}, {transform_indices = @transform_3, window_bounds = array<i64: 2, 4, 256>}, {pipeline_mode = #tpu.pipeline_mode<synchronous>, transform_indices = @transform_4, window_bounds = array<i64: 1, 4, 1>}, {pipeline_mode = #tpu.pipeline_mode<synchronous>, transform_indices = @transform_5, window_bounds = array<i64: 1, 4, 1>}, {pipeline_mode = #tpu.pipeline_mode<synchronous>, transform_indices = @transform_6, window_bounds = array<i64: 1, 4, 1>}, {pipeline_mode = #tpu.pipeline_mode<synchronous>, transform_indices = @transform_7, window_bounds = array<i64: 1, 4, 1>}]} {
    %c0_i32 = arith.constant 0 : i32
    %0 = arith.cmpi eq, %arg0, %c0_i32 : i32
    %c0_i32_0 = arith.constant 0 : i32
    %1 = arith.cmpi eq, %arg1, %c0_i32_0 : i32
    %2 = arith.andi %0, %1 : i1
    %3 = arith.extui %2 : i1 to i32
    %c0_i32_1 = arith.constant 0 : i32
    %4 = arith.cmpi ne, %3, %c0_i32_1 : i32
    scf.if %4 {
      %cst = arith.constant 0.000000e+00 : f32
      %16 = vector.broadcast %cst : f32 to vector<1x4x1xf32>
      %c0 = arith.constant 0 : index
      %c0_8 = arith.constant 0 : index
      %c0_9 = arith.constant 0 : index
      %17 = vector.load %arg10[%c0, %c0_8, %c0_9] : memref<1x4x1xf32, #tpu.memory_space<vmem>>, vector<1x4x1xf32>
      tpu.vector_store %arg10[%c0, %c0_8, %c0_9], %16 {strides = array<i32>} : memref<1x4x1xf32, #tpu.memory_space<vmem>>, vector<1x4x1xf32>,
      %cst_10 = arith.constant 0.000000e+00 : f32
      %18 = vector.broadcast %cst_10 : f32 to vector<1x4x1xf32>
      %c0_11 = arith.constant 0 : index
      %c0_12 = arith.constant 0 : index
      %c0_13 = arith.constant 0 : index
      %19 = vector.load %arg11[%c0_11, %c0_12, %c0_13] : memref<1x4x1xf32, #tpu.memory_space<vmem>>, vector<1x4x1xf32>
      tpu.vector_store %arg11[%c0_11, %c0_12, %c0_13], %18 {strides = array<i32>} : memref<1x4x1xf32, #tpu.memory_space<vmem>>, vector<1x4x1xf32>,
    } else {
    }
    %c0_i32_2 = arith.constant 0 : i32
    %5 = arith.cmpi eq, %arg0, %c0_i32_2 : i32
    %6 = arith.extui %5 : i1 to i32
    %c0_i32_3 = arith.constant 0 : i32
    %7 = arith.cmpi ne, %6, %c0_i32_3 : i32
    scf.if %7 {
      %c0 = arith.constant 0 : index
      %c0_8 = arith.constant 0 : index
      %c0_9 = arith.constant 0 : index
      %16 = vector.load %arg2[%c0, %c0_8, %c0_9] : memref<2x4x256xf32, #tpu.memory_space<vmem>>, vector<2x4x256xf32>
      %cst = arith.constant dense<0.000000e+00> : vector<2x4xf32>
      %17 = vector.multi_reduction <add>, %16, %cst [2] : vector<2x4x256xf32> to vector<2x4xf32>
      %18 = vector.shape_cast %17 : vector<2x4xf32> to vector<2x4x1xf32>
      %cst_10 = arith.constant dense<0.000000e+00> : vector<4x1xf32>
      %19 = vector.multi_reduction <add>, %18, %cst_10 [0] : vector<2x4x1xf32> to vector<4x1xf32>
      %20 = vector.shape_cast %19 : vector<4x1xf32> to vector<1x4x1xf32>
      %21 = arith.mulf %16, %16 : vector<2x4x256xf32>
      %cst_11 = arith.constant dense<0.000000e+00> : vector<2x4xf32>
      %22 = vector.multi_reduction <add>, %21, %cst_11 [2] : vector<2x4x256xf32> to vector<2x4xf32>
      %23 = vector.shape_cast %22 : vector<2x4xf32> to vector<2x4x1xf32>
      %cst_12 = arith.constant dense<0.000000e+00> : vector<4x1xf32>
      %24 = vector.multi_reduction <add>, %23, %cst_12 [0] : vector<2x4x1xf32> to vector<4x1xf32>
      %25 = vector.shape_cast %24 : vector<4x1xf32> to vector<1x4x1xf32>
      %c0_13 = arith.constant 0 : index
      %c0_14 = arith.constant 0 : index
      %c0_15 = arith.constant 0 : index
      %26 = vector.load %arg10[%c0_13, %c0_14, %c0_15] : memref<1x4x1xf32, #tpu.memory_space<vmem>>, vector<1x4x1xf32>
      %27 = arith.addf %26, %20 : vector<1x4x1xf32>
      %c0_16 = arith.constant 0 : index
      %c0_17 = arith.constant 0 : index
      %c0_18 = arith.constant 0 : index
      %28 = vector.load %arg10[%c0_16, %c0_17, %c0_18] : memref<1x4x1xf32, #tpu.memory_space<vmem>>, vector<1x4x1xf32>
      tpu.vector_store %arg10[%c0_16, %c0_17, %c0_18], %27 {strides = array<i32>} : memref<1x4x1xf32, #tpu.memory_space<vmem>>, vector<1x4x1xf32>,
      %c0_19 = arith.constant 0 : index
      %c0_20 = arith.constant 0 : index
      %c0_21 = arith.constant 0 : index
      %29 = vector.load %arg11[%c0_19, %c0_20, %c0_21] : memref<1x4x1xf32, #tpu.memory_space<vmem>>, vector<1x4x1xf32>
      %30 = arith.addf %29, %25 : vector<1x4x1xf32>
      %c0_22 = arith.constant 0 : index
      %c0_23 = arith.constant 0 : index
      %c0_24 = arith.constant 0 : index
      %31 = vector.load %arg11[%c0_22, %c0_23, %c0_24] : memref<1x4x1xf32, #tpu.memory_space<vmem>>, vector<1x4x1xf32>
      tpu.vector_store %arg11[%c0_22, %c0_23, %c0_24], %30 {strides = array<i32>} : memref<1x4x1xf32, #tpu.memory_space<vmem>>, vector<1x4x1xf32>,
    } else {
    }
    %c1_i32 = arith.constant 1 : i32
    %8 = arith.cmpi eq, %arg0, %c1_i32 : i32
    %c0_i32_4 = arith.constant 0 : i32
    %9 = arith.cmpi eq, %arg1, %c0_i32_4 : i32
    %10 = arith.andi %8, %9 : i1
    %11 = arith.extui %10 : i1 to i32
    %c0_i32_5 = arith.constant 0 : i32
    %12 = arith.cmpi ne, %11, %c0_i32_5 : i32
    scf.if %12 {
      %c0 = arith.constant 0 : index
      %c0_8 = arith.constant 0 : index
      %c0_9 = arith.constant 0 : index
      %16 = vector.load %arg10[%c0, %c0_8, %c0_9] : memref<1x4x1xf32, #tpu.memory_space<vmem>>, vector<1x4x1xf32>
      %cst = arith.constant 0.001953125 : f32
      %17 = vector.broadcast %cst : f32 to vector<1x4x1xf32>
      %18 = arith.mulf %16, %17 : vector<1x4x1xf32>
      %c0_10 = arith.constant 0 : index
      %c0_11 = arith.constant 0 : index
      %c0_12 = arith.constant 0 : index
      %19 = vector.load %arg11[%c0_10, %c0_11, %c0_12] : memref<1x4x1xf32, #tpu.memory_space<vmem>>, vector<1x4x1xf32>
      %cst_13 = arith.constant 5.120000e+02 : f32
      %20 = vector.broadcast %cst_13 : f32 to vector<1x4x1xf32>
      %21 = arith.mulf %20, %18 : vector<1x4x1xf32>
      %22 = arith.mulf %21, %18 : vector<1x4x1xf32>
      %23 = arith.subf %19, %22 : vector<1x4x1xf32>
      %cst_14 = arith.constant 5.110000e+02 : f32
      %24 = vector.broadcast %cst_14 : f32 to vector<1x4x1xf32>
      %25 = arith.divf %23, %24 : vector<1x4x1xf32>
      %c0_15 = arith.constant 0 : index
      %c0_16 = arith.constant 0 : index
      %c0_17 = arith.constant 0 : index
      %26 = vector.load %arg3[%c0_15, %c0_16, %c0_17] : memref<1x4x1xf32, #tpu.memory_space<vmem>>, vector<1x4x1xf32>
      %cst_18 = arith.constant 9.99999974E-6 : f32
      %27 = vector.broadcast %cst_18 : f32 to vector<1x4x1xf32>
      %28 = arith.addf %25, %27 : vector<1x4x1xf32>
      %29 = math.rsqrt %28 : vector<1x4x1xf32>
      %30 = arith.mulf %26, %29 : vector<1x4x1xf32>
      %c0_19 = arith.constant 0 : index
      %c0_20 = arith.constant 0 : index
      %c0_21 = arith.constant 0 : index
      %31 = vector.load %arg4[%c0_19, %c0_20, %c0_21] : memref<1x4x1xf32, #tpu.memory_space<vmem>>, vector<1x4x1xf32>
      %32 = arith.mulf %18, %30 : vector<1x4x1xf32>
      %33 = arith.subf %31, %32 : vector<1x4x1xf32>
      %c0_22 = arith.constant 0 : index
      %c0_23 = arith.constant 0 : index
      %c0_24 = arith.constant 0 : index
      %34 = vector.load %arg12[%c0_22, %c0_23, %c0_24] : memref<1x4x1xf32, #tpu.memory_space<vmem>>, vector<1x4x1xf32>
      tpu.vector_store %arg12[%c0_22, %c0_23, %c0_24], %30 {strides = array<i32>} : memref<1x4x1xf32, #tpu.memory_space<vmem>>, vector<1x4x1xf32>,
      %c0_25 = arith.constant 0 : index
      %c0_26 = arith.constant 0 : index
      %c0_27 = arith.constant 0 : index
      %35 = vector.load %arg13[%c0_25, %c0_26, %c0_27] : memref<1x4x1xf32, #tpu.memory_space<vmem>>, vector<1x4x1xf32>
      tpu.vector_store %arg13[%c0_25, %c0_26, %c0_27], %33 {strides = array<i32>} : memref<1x4x1xf32, #tpu.memory_space<vmem>>, vector<1x4x1xf32>,
      %c0_28 = arith.constant 0 : index
      %c0_29 = arith.constant 0 : index
      %c0_30 = arith.constant 0 : index
      %36 = vector.load %arg6[%c0_28, %c0_29, %c0_30] : memref<1x4x1xf32, #tpu.memory_space<vmem>>, vector<1x4x1xf32>
      tpu.vector_store %arg6[%c0_28, %c0_29, %c0_30], %30 {strides = array<i32>} : memref<1x4x1xf32, #tpu.memory_space<vmem>>, vector<1x4x1xf32>,
      %c0_31 = arith.constant 0 : index
      %c0_32 = arith.constant 0 : index
      %c0_33 = arith.constant 0 : index
      %37 = vector.load %arg7[%c0_31, %c0_32, %c0_33] : memref<1x4x1xf32, #tpu.memory_space<vmem>>, vector<1x4x1xf32>
      tpu.vector_store %arg7[%c0_31, %c0_32, %c0_33], %33 {strides = array<i32>} : memref<1x4x1xf32, #tpu.memory_space<vmem>>, vector<1x4x1xf32>,
      %c0_34 = arith.constant 0 : index
      %c0_35 = arith.constant 0 : index
      %c0_36 = arith.constant 0 : index
      %38 = vector.load %arg8[%c0_34, %c0_35, %c0_36] : memref<1x4x1xf32, #tpu.memory_space<vmem>>, vector<1x4x1xf32>
      tpu.vector_store %arg8[%c0_34, %c0_35, %c0_36], %18 {strides = array<i32>} : memref<1x4x1xf32, #tpu.memory_space<vmem>>, vector<1x4x1xf32>,
      %c0_37 = arith.constant 0 : index
      %c0_38 = arith.constant 0 : index
      %c0_39 = arith.constant 0 : index
      %39 = vector.load %arg9[%c0_37, %c0_38, %c0_39] : memref<1x4x1xf32, #tpu.memory_space<vmem>>, vector<1x4x1xf32>
      tpu.vector_store %arg9[%c0_37, %c0_38, %c0_39], %25 {strides = array<i32>} : memref<1x4x1xf32, #tpu.memory_space<vmem>>, vector<1x4x1xf32>,
    } else {
    }
    %c1_i32_6 = arith.constant 1 : i32
    %13 = arith.cmpi eq, %arg0, %c1_i32_6 : i32
    %14 = arith.extui %13 : i1 to i32
    %c0_i32_7 = arith.constant 0 : i32
    %15 = arith.cmpi ne, %14, %c0_i32_7 : i32
    scf.if %15 {
      %c0 = arith.constant 0 : index
      %c0_8 = arith.constant 0 : index
      %c0_9 = arith.constant 0 : index
      %16 = vector.load %arg2[%c0, %c0_8, %c0_9] : memref<2x4x256xf32, #tpu.memory_space<vmem>>, vector<2x4x256xf32>
      %c0_10 = arith.constant 0 : index
      %c0_11 = arith.constant 0 : index
      %c0_12 = arith.constant 0 : index
      %17 = vector.load %arg12[%c0_10, %c0_11, %c0_12] : memref<1x4x1xf32, #tpu.memory_space<vmem>>, vector<1x4x1xf32>
      %18 = vector.broadcast %17 : vector<1x4x1xf32> to vector<2x4x256xf32>
      %19 = arith.mulf %16, %18 : vector<2x4x256xf32>
      %c0_13 = arith.constant 0 : index
      %c0_14 = arith.constant 0 : index
      %c0_15 = arith.constant 0 : index
      %20 = vector.load %arg13[%c0_13, %c0_14, %c0_15] : memref<1x4x1xf32, #tpu.memory_space<vmem>>, vector<1x4x1xf32>
      %21 = vector.broadcast %20 : vector<1x4x1xf32> to vector<2x4x256xf32>
      %22 = arith.addf %19, %21 : vector<2x4x256xf32>
      %c0_16 = arith.constant 0 : index
      %c0_17 = arith.constant 0 : index
      %c0_18 = arith.constant 0 : index
      %23 = vector.load %arg5[%c0_16, %c0_17, %c0_18] : memref<2x4x256xf32, #tpu.memory_space<vmem>>, vector<2x4x256xf32>
      tpu.vector_store %arg5[%c0_16, %c0_17, %c0_18], %22 {strides = array<i32>} : memref<2x4x256xf32, #tpu.memory_space<vmem>>, vector<2x4x256xf32>,
    } else {
    }
    return
  }
  func.func @transform_0(%arg0: i32, %arg1: i32) -> (i32, i32, i32) {
    %c0_i32 = arith.constant 0 : i32
    %c0_i32_0 = arith.constant 0 : i32
    %c0_i32_1 = arith.constant 0 : i32
    return %arg1, %c0_i32, %c0_i32_0 : i32, i32, i32
  }
  func.func @transform_1(%arg0: i32, %arg1: i32) -> (i32, i32, i32) {
    %c0_i32 = arith.constant 0 : i32
    %c0_i32_0 = arith.constant 0 : i32
    %c0_i32_1 = arith.constant 0 : i32
    %c0_i32_2 = arith.constant 0 : i32
    return %c0_i32, %c0_i32_0, %c0_i32_1 : i32, i32, i32
  }
  func.func @transform_2(%arg0: i32, %arg1: i32) -> (i32, i32, i32) {
    %c0_i32 = arith.constant 0 : i32
    %c0_i32_0 = arith.constant 0 : i32
    %c0_i32_1 = arith.constant 0 : i32
    %c0_i32_2 = arith.constant 0 : i32
    return %c0_i32, %c0_i32_0, %c0_i32_1 : i32, i32, i32
  }
  func.func @transform_3(%arg0: i32, %arg1: i32) -> (i32, i32, i32) {
    %0 = arith.muli %arg0, %arg1 : i32
    %c0_i32 = arith.constant 0 : i32
    %c0_i32_0 = arith.constant 0 : i32
    %c0_i32_1 = arith.constant 0 : i32
    return %0, %c0_i32, %c0_i32_0 : i32, i32, i32
  }
  func.func @transform_4(%arg0: i32, %arg1: i32) -> (i32, i32, i32) {
    %c0_i32 = arith.constant 0 : i32
    %c0_i32_0 = arith.constant 0 : i32
    %c0_i32_1 = arith.constant 0 : i32
    %c0_i32_2 = arith.constant 0 : i32
    return %c0_i32, %c0_i32_0, %c0_i32_1 : i32, i32, i32
  }
  func.func @transform_5(%arg0: i32, %arg1: i32) -> (i32, i32, i32) {
    %c0_i32 = arith.constant 0 : i32
    %c0_i32_0 = arith.constant 0 : i32
    %c0_i32_1 = arith.constant 0 : i32
    %c0_i32_2 = arith.constant 0 : i32
    return %c0_i32, %c0_i32_0, %c0_i32_1 : i32, i32, i32
  }
  func.func @transform_6(%arg0: i32, %arg1: i32) -> (i32, i32, i32) {
    %c0_i32 = arith.constant 0 : i32
    %c0_i32_0 = arith.constant 0 : i32
    %c0_i32_1 = arith.constant 0 : i32
    %c0_i32_2 = arith.constant 0 : i32
    return %c0_i32, %c0_i32_0, %c0_i32_1 : i32, i32, i32
  }
  func.func @transform_7(%arg0: i32, %arg1: i32) -> (i32, i32, i32) {
    %c0_i32 = arith.constant 0 : i32
    %c0_i32_0 = arith.constant 0 : i32
    %c0_i32_1 = arith.constant 0 : i32
    %c0_i32_2 = arith.constant 0 : i32
    return %c0_i32, %c0_i32_0, %c0_i32_1 : i32, i32, i32
  }
}

</mosaic_0001>

<llo_original>
// kernel: _bn_forward.1
$region0: #{_bn_forward.1}
  #allocation0 [shape = 'u32[]', space=smem, size = 0x4, offset = 0x4, fixed_abs, tag = 'smem constant byte address 0x4 - core index']
  #allocation1 [shape = 'u32[144,128]{1,0:T(1,128)}', space=vmem, size = 0x12000, scoped, tag = 'internal scratch']
  #allocation2 [shape = 'f32[1,4,1]{2,1,0:T(4,128)}', space=vmem, size = 0x800, scoped, tag = 'scratch operand']
  #allocation3 [shape = 'f32[1,4,1]{2,1,0:T(4,128)}', space=vmem, size = 0x800, scoped, tag = 'scratch operand']
  #allocation4 [shape = 'f32[1,4,1]{2,1,0:T(4,128)}', space=vmem, size = 0x800, scoped, tag = 'scratch operand']
  #allocation5 [shape = 'f32[1,4,1]{2,1,0:T(4,128)}', space=vmem, size = 0x800, scoped, tag = 'scratch operand']
  %s0 = inlined_call_operand.vmem [shape: f32[2,4,256], index: 0, kind: input, shape index: {}]
  %s1 = inlined_call_operand.vmem [shape: f32[1,4,1], index: 1, kind: input, shape index: {}]
  %s2 = inlined_call_operand.vmem [shape: f32[1,4,1], index: 2, kind: input, shape index: {}]
  %s3 = inlined_call_operand.vmem [shape: f32[2,4,256], index: 3, kind: output, shape index: {0}]
  %s4 = inlined_call_operand.vmem [shape: f32[1,4,1], index: 4, kind: output, shape index: {1}]
  %s5 = inlined_call_operand.vmem [shape: f32[1,4,1], index: 5, kind: output, shape index: {2}]
  %s6 = inlined_call_operand.vmem [shape: f32[1,4,1], index: 6, kind: output, shape index: {3}]
  %s7 = inlined_call_operand.vmem [shape: f32[1,4,1], index: 7, kind: output, shape index: {4}]
  %8 = xla_tuple %s3, %s4, %s5, %s6, %s7
  %s9 = sld [smem:[#allocation0]]
  $region93: #{_bn_forward.1} parent=0
    _
  %s11 = ssub.s32 1, %s9
  %s12 = scalar_select 0, %s11, %s9
  loop: start=0, step=1, limit=4
  $region2: #{_bn_forward.1} parent=0 // loop_pre_header
    _
  $region3: #{_bn_forward.1} parent=0 // loop_header
    %s14 = sphi 0, %s18
    %p15 = scmp.ge.s32.totalorder %s14, 4
    %s21 = sphi 0, %s33
    %s22 = sphi 0, %s29
    %s23 = sphi 0, %s21
    %s24 = sphi 0, %s22
    %s25 = sphi 0, %s23
    %s26 = sphi 0, %s24
    %s36 = sphi 0, %s38
    %s39 = sphi 0, %s36
    %s40 = sphi 0, %s39
    %s56 = sphi 0, %s40
    %s60 = sphi 0, %s60
    %s62 = sphi 0, %s60
    %s63 = sphi 0, %s62
    %s77 = sphi 0, %s63
    %s81 = sphi 0, %s81
    %s83 = sphi 0, %s81
    %s84 = sphi 0, %s83
    %s98 = sphi 0, %s84
    %s106 = sphi 0, %s108
    %s109 = sphi 0, %s106
    %s110 = sphi 0, %s109
    %s126 = sphi 0, %s110
    %s130 = sphi 0, %s130
    %s132 = sphi 0, %s130
    %s133 = sphi 0, %s132
    %s147 = sphi 0, %s133
    %s151 = sphi 0, %s151
    %s153 = sphi 0, %s151
    %s154 = sphi 0, %s153
    %s168 = sphi 0, %s154
    %s172 = sphi 0, %s172
    %s174 = sphi 0, %s172
    %s175 = sphi 0, %s174
    %s189 = sphi 0, %s175
    %s193 = sphi 0, %s193
    %s195 = sphi 0, %s193
    %s196 = sphi 0, %s195
    %s210 = sphi 0, %s196
  $region4: #{_bn_forward.1} parent=0 // loop_header_branch
    %17 = sbr.rel (%p15) target = $region8
  $region5: #{_bn_forward.1} parent=0 // loop_body
    %s19 = ssub.s32 %s14, 1
    %s20 = ssub.s32 %s14, 2
    %s27 = sadd.s32 1, %s22
    %p28 = scmp.ge.s32.totalorder %s27, 1
    %s29 = scalar_select %p28, 0, %s27
    %s30 = sadd.s32 1, %s21
    %s31 = scalar_select %p28, %s30, %s21
    %p32 = scmp.ge.s32.totalorder %s31, 2
    %s33 = scalar_select %p32, 0, %s31
    %s34 = ssub.s32 %s22, %s29
    %p35 = scmp.eq.s32.totalorder %s34, 0
    %s37 = sadd.s32 %s36, 1
    %s38 = scalar_select %p35, %s36, %s37
    %p41 = pneg %p35
    %p42 = scmp.eq.s32.totalorder %s14, 1
    %p43 = por %p41, %p42
    %p44 = scmp.ne.s32.totalorder %s36, %s39
    %p45 = scmp.eq.s32.totalorder %s14, 0
    %p46 = por %p44, %p45
    %p47 = scmp.ne.s32.totalorder %s36, %s39
    %p48 = scmp.eq.s32.totalorder %s19, 1
    %p49 = por %p47, %p48
    %p50 = scmp.ne.s32.totalorder %s39, %s40
    %p51 = scmp.eq.s32.totalorder %s19, 0
    %p52 = por %p50, %p51
    %p53 = scmp.ne.s32.totalorder %s39, %s40
    %p54 = scmp.eq.s32.totalorder %s20, 1
    %p55 = por %p53, %p54
    %p57 = scmp.ne.s32.totalorder %s40, %s56
    %p58 = scmp.eq.s32.totalorder %s20, 0
    %p59 = por %p57, %p58
    %s61 = sadd.s32 %s60, 1
    %p64 = scmp.eq.s32.totalorder %s14, 1
    %p65 = scmp.ne.s32.totalorder %s60, %s62
    %p66 = scmp.eq.s32.totalorder %s14, 0
    %p67 = por %p65, %p66
    %p68 = scmp.ne.s32.totalorder %s60, %s62
    %p69 = scmp.eq.s32.totalorder %s19, 1
    %p70 = por %p68, %p69
    %p71 = scmp.ne.s32.totalorder %s62, %s63
    %p72 = scmp.eq.s32.totalorder %s19, 0
    %p73 = por %p71, %p72
    %p74 = scmp.ne.s32.totalorder %s62, %s63
    %p75 = scmp.eq.s32.totalorder %s20, 1
    %p76 = por %p74, %p75
    %p78 = scmp.ne.s32.totalorder %s63, %s77
    %p79 = scmp.eq.s32.totalorder %s20, 0
    %p80 = por %p78, %p79
    %s82 = sadd.s32 %s81, 1
    %p85 = scmp.eq.s32.totalorder %s14, 1
    %p86 = scmp.ne.s32.totalorder %s81, %s83
    %p87 = scmp.eq.s32.totalorder %s14, 0
    %p88 = por %p86, %p87
    %p89 = scmp.ne.s32.totalorder %s81, %s83
    %p90 = scmp.eq.s32.totalorder %s19, 1
    %p91 = por %p89, %p90
    %p92 = scmp.ne.s32.totalorder %s83, %s84
    %p93 = scmp.eq.s32.totalorder %s19, 0
    %p94 = por %p92, %p93
    %p95 = scmp.ne.s32.totalorder %s83, %s84
    %p96 = scmp.eq.s32.totalorder %s20, 1
    %p97 = por %p95, %p96
    %p99 = scmp.ne.s32.totalorder %s84, %s98
    %p100 = scmp.eq.s32.totalorder %s20, 0
    %p101 = por %p99, %p100
    %s102 = smul.u32 %s21, %s22
    %s103 = smul.u32 %s33, %s29
    %s104 = ssub.s32 %s102, %s103
    %p105 = scmp.eq.s32.totalorder %s104, 0
    %s107 = sadd.s32 %s106, 1
    %s108 = scalar_select %p105, %s106, %s107
    %p111 = pneg %p105
    %p112 = scmp.eq.s32.totalorder %s14, 1
    %p113 = por %p111, %p112
    %p114 = scmp.ne.s32.totalorder %s106, %s109
    %p115 = scmp.eq.s32.totalorder %s14, 0
    %p116 = por %p114, %p115
    %p117 = scmp.ne.s32.totalorder %s106, %s109
    %p118 = scmp.eq.s32.totalorder %s19, 1
    %p119 = por %p117, %p118
    %p120 = scmp.ne.s32.totalorder %s109, %s110
    %p121 = scmp.eq.s32.totalorder %s19, 0
    %p122 = por %p120, %p121
    %p123 = scmp.ne.s32.totalorder %s109, %s110
    %p124 = scmp.eq.s32.totalorder %s20, 1
    %p125 = por %p123, %p124
    %p127 = scmp.ne.s32.totalorder %s110, %s126
    %p128 = scmp.eq.s32.totalorder %s20, 0
    %p129 = por %p127, %p128
    %s131 = sadd.s32 %s130, 1
    %p134 = scmp.eq.s32.totalorder %s14, 1
    %p135 = scmp.ne.s32.totalorder %s130, %s132
    %p136 = scmp.eq.s32.totalorder %s14, 0
    %p137 = por %p135, %p136
    %p138 = scmp.ne.s32.totalorder %s130, %s132
    %p139 = scmp.eq.s32.totalorder %s19, 1
    %p140 = por %p138, %p139
    %p141 = scmp.ne.s32.totalorder %s132, %s133
    %p142 = scmp.eq.s32.totalorder %s19, 0
    %p143 = por %p141, %p142
    %p144 = scmp.ne.s32.totalorder %s132, %s133
    %p145 = scmp.eq.s32.totalorder %s20, 1
    %p146 = por %p144, %p145
    %p148 = scmp.ne.s32.totalorder %s133, %s147
    %p149 = scmp.eq.s32.totalorder %s20, 0
    %p150 = por %p148, %p149
    %s152 = sadd.s32 %s151, 1
    %p155 = scmp.eq.s32.totalorder %s14, 1
    %p156 = scmp.ne.s32.totalorder %s151, %s153
    %p157 = scmp.eq.s32.totalorder %s14, 0
    %p158 = por %p156, %p157
    %p159 = scmp.ne.s32.totalorder %s151, %s153
    %p160 = scmp.eq.s32.totalorder %s19, 1
    %p161 = por %p159, %p160
    %p162 = scmp.ne.s32.totalorder %s153, %s154
    %p163 = scmp.eq.s32.totalorder %s19, 0
    %p164 = por %p162, %p163
    %p165 = scmp.ne.s32.totalorder %s153, %s154
    %p166 = scmp.eq.s32.totalorder %s20, 1
    %p167 = por %p165, %p166
    %p169 = scmp.ne.s32.totalorder %s154, %s168
    %p170 = scmp.eq.s32.totalorder %s20, 0
    %p171 = por %p169, %p170
    %s173 = sadd.s32 %s172, 1
    %p176 = scmp.eq.s32.totalorder %s14, 1
    %p177 = scmp.ne.s32.totalorder %s172, %s174
    %p178 = scmp.eq.s32.totalorder %s14, 0
    %p179 = por %p177, %p178
    %p180 = scmp.ne.s32.totalorder %s172, %s174
    %p181 = scmp.eq.s32.totalorder %s19, 1
    %p182 = por %p180, %p181
    %p183 = scmp.ne.s32.totalorder %s174, %s175
    %p184 = scmp.eq.s32.totalorder %s19, 0
    %p185 = por %p183, %p184
    %p186 = scmp.ne.s32.totalorder %s174, %s175
    %p187 = scmp.eq.s32.totalorder %s20, 1
    %p188 = por %p186, %p187
    %p190 = scmp.ne.s32.totalorder %s175, %s189
    %p191 = scmp.eq.s32.totalorder %s20, 0
    %p192 = por %p190, %p191
    %s194 = sadd.s32 %s193, 1
    %p197 = scmp.eq.s32.totalorder %s14, 1
    %p198 = scmp.ne.s32.totalorder %s193, %s195
    %p199 = scmp.eq.s32.totalorder %s14, 0
    %p200 = por %p198, %p199
    %p201 = scmp.ne.s32.totalorder %s193, %s195
    %p202 = scmp.eq.s32.totalorder %s19, 1
    %p203 = por %p201, %p202
    %p204 = scmp.ne.s32.totalorder %s195, %s196
    %p205 = scmp.eq.s32.totalorder %s19, 0
    %p206 = por %p204, %p205
    %p207 = scmp.ne.s32.totalorder %s195, %s196
    %p208 = scmp.eq.s32.totalorder %s20, 1
    %p209 = por %p207, %p208
    %p211 = scmp.ne.s32.totalorder %s196, %s210
    %p212 = scmp.eq.s32.totalorder %s20, 0
    %p213 = por %p211, %p212
    %p214 = scmp.le.s32.totalorder 1, %s14
    %p215 = scmp.lt.s32.totalorder %s14, 3
    %p216 = pnand %p214, %p215
    %p217 = pneg %p216
    // Predicated region
    $region9: #{_bn_forward.1} parent=5 // pred_check
      _
    $region10: #{_bn_forward.1} parent=5 // pred_check_branch
      %219 = sbr.rel (%p216) target = $region12
    $region11: #{_bn_forward.1} parent=5 // pred_region
      %s220 = ssub.s32 %s14, 1
      // Predicated region
      $region13: #{_bn_forward.1} parent=11 // pred_check
        %p221 = pneg %p52
      $region14: #{_bn_forward.1} parent=11 // pred_check_branch
        %223 = sbr.rel (%p221) target = $region16
      $region15: #{_bn_forward.1} parent=11 // pred_region
        %s224 = smul.u32 2, %s24
        %p225 = scmp.lt.s32.totalorder %s224, 1
        %s226 = scalar_select %p225, %s224, 1
        %s227 = smul.addr %s226, 2
        %s228 = smul.addr %s227, 4
        %s229 = scalar_lea.vmem %s0, %s228
        %s230 = smul.u32 2, %s24
      $region16: #{_bn_forward.1} parent=11 // pred_fallthru
        _
      // Predicated region
      $region17: #{_bn_forward.1} parent=11 // pred_check
        %p231 = pneg %p73
      $region18: #{_bn_forward.1} parent=11 // pred_check_branch
        %233 = sbr.rel (%p231) target = $region20
      $region19: #{_bn_forward.1} parent=11 // pred_region
        _
      $region20: #{_bn_forward.1} parent=11 // pred_fallthru
        _
      // Predicated region
      $region21: #{_bn_forward.1} parent=11 // pred_check
        %p234 = pneg %p94
      $region22: #{_bn_forward.1} parent=11 // pred_check_branch
        %236 = sbr.rel (%p234) target = $region24
      $region23: #{_bn_forward.1} parent=11 // pred_region
        _
      $region24: #{_bn_forward.1} parent=11 // pred_fallthru
        _
    $region12: #{_bn_forward.1} parent=5 // pred_fallthru
      _
    %p237 = scmp.lt.s32.totalorder %s14, 2
    // Predicated region
    $region25: #{_bn_forward.1} parent=5 // pred_check
      %p238 = pneg %p237
    $region26: #{_bn_forward.1} parent=5 // pred_check_branch
      %240 = sbr.rel (%p238) target = $region28
    $region27: #{_bn_forward.1} parent=5 // pred_region
      _
    $region28: #{_bn_forward.1} parent=5 // pred_fallthru
      _
    %p241 = scmp.le.s32.totalorder 1, %s14
    %p242 = scmp.lt.s32.totalorder %s14, 3
    %p243 = pnand %p241, %p242
    %p244 = pneg %p243
    // Predicated region
    $region29: #{_bn_forward.1} parent=5 // pred_check
      _
    $region30: #{_bn_forward.1} parent=5 // pred_check_branch
      %246 = sbr.rel (%p243) target = $region32
    $region31: #{_bn_forward.1} parent=5 // pred_region
      %s247 = ssub.s32 %s14, 1
      %s248 = smul.u32 2, %s24
      %p249 = scmp.lt.s32.totalorder %s248, 1
      %s250 = scalar_select %p249, %s248, 1
      %s251 = smul.addr %s250, 2
      %s252 = smul.addr %s251, 4
      %s253 = scalar_lea.vmem %s0, %s252
      %p254 = pneg %p52
      %p255 = pneg %p49
      %p256 = pneg %p73
      %p257 = pneg %p70
      %p258 = pneg %p94
      %p259 = pneg %p91
      %p260 = pneg %p122
      %p261 = pneg %p119
      %s262 = smul.u32 %s23, %s24
      %s263 = smul.u32 2, %s262
      %p264 = scmp.lt.s32.totalorder %s263, 1
      %s265 = scalar_select %p264, %s263, 1
      %s266 = smul.addr %s265, 2
      %s267 = smul.addr %s266, 4
      %s268 = scalar_lea.vmem %s3, %s267
      %p269 = pneg %p143
      %p270 = pneg %p140
      %p271 = pneg %p164
      %p272 = pneg %p161
      %p273 = pneg %p185
      %p274 = pneg %p182
      %p275 = pneg %p206
      %p276 = pneg %p203
      %s277 = smul.u32 2, %s24
      %p278 = scmp.lt.s32.totalorder %s277, 1
      %s279 = scalar_select %p278, %s277, 1
      %s280 = smul.addr %s279, 2
      %s281 = smul.addr %s280, 4
      %s282 = scalar_lea.vmem %s0, %s281
      %s283 = smul.u32 2, %s24
      %s284 = smul.u32 %s23, %s24
      %s285 = smul.u32 2, %s284
      %p286 = scmp.lt.s32.totalorder %s285, 1
      %s287 = scalar_select %p286, %s285, 1
      %s288 = smul.addr %s287, 2
      %s289 = smul.addr %s288, 4
      %s290 = scalar_lea.vmem %s3, %s289
      %s291 = smul.u32 %s23, %s24
      %s292 = smul.u32 2, %s291
      %p293 = scmp.eq.s32.totalorder %s23, 0
      %p294 = scmp.eq.s32.totalorder %s24, 0
      %p295 = pnand %p293, %p294
      %p296 = pneg %p295
      // Predicated region
      $region33: #{_bn_forward.1} parent=31 // pred_check
        _
      $region34: #{_bn_forward.1} parent=31 // pred_check_branch
        %298 = sbr.rel (%p295) target = $region36
      $region35: #{_bn_forward.1} parent=31 // pred_region
        %vm299 = vcmask 3072
        %300 = vst.msk [vmem:[#allocation2] sm:$0xf] %vm299, 0.0
        %301 = vst.msk [vmem:[#allocation3] sm:$0xf] %vm299, 0.0
      $region36: #{_bn_forward.1} parent=31 // pred_fallthru
        _
      // Predicated region
      $region37: #{_bn_forward.1} parent=31 // pred_check
        %p302 = pneg %p293
      $region38: #{_bn_forward.1} parent=31 // pred_check_branch
        %304 = sbr.rel (%p302) target = $region40
      $region39: #{_bn_forward.1} parent=31 // pred_region
        %v305 = vld [vmem:[%s282] sm:$0xff]
        %v306 = vld [vmem:[%s282 + $0x8] sm:$0xff]
        %v309 = vcombine.high %v305, %v305
        %v310 = vcombine.high %v306, %v306
        %vm313 = vcmask 1043456
        %v314 = vsel %vm313, %v305, 0.0
        %v315 = vsel %vm313, %v309, 0.0
        %v316 = vadd.f32 %v314, %v315
        %317 = vadd.xlane.f32.xlu0 %v316
        %v318 = vpop.xlane.xlu0 %317
        %v319 = vsel %vm313, %v306, 0.0
        %v320 = vsel %vm313, %v310, 0.0
        %v321 = vadd.f32 %v319, %v320
        %322 = vadd.xlane.f32.xlu0 %v321
        %v323 = vpop.xlane.xlu0 %322
        %v324 = vsel %vm313, %v318, 0.0
        %v325 = vsel %vm313, %v323, 0.0
        %v326 = vadd.f32 %v324, %v325
        %v327 = vmul.f32 %v305, %v305
        %v328 = vmul.f32 %v306, %v306
        %v331 = vcombine.high %v327, %v327
        %v332 = vcombine.high %v328, %v328
        %v335 = vsel %vm313, %v327, 0.0
        %v336 = vsel %vm313, %v331, 0.0
        %v337 = vadd.f32 %v335, %v336
        %338 = vadd.xlane.f32.xlu0 %v337
        %v339 = vpop.xlane.xlu0 %338
        %v340 = vsel %vm313, %v328, 0.0
        %v341 = vsel %vm313, %v332, 0.0
        %v342 = vadd.f32 %v340, %v341
        %343 = vadd.xlane.f32.xlu0 %v342
        %v344 = vpop.xlane.xlu0 %343
        %v345 = vsel %vm313, %v339, 0.0
        %v346 = vsel %vm313, %v344, 0.0
        %v347 = vadd.f32 %v345, %v346
        %v348 = vld [vmem:[#allocation2] sm:$0xf]
        %v349 = vadd.f32 %v348, %v326
        %vm350 = vcmask 3072
        %351 = vst.msk [vmem:[#allocation2] sm:$0xf] %vm350, %v349
        %v352 = vld [vmem:[#allocation3] sm:$0xf]
        %v353 = vadd.f32 %v352, %v347
        %354 = vst.msk [vmem:[#allocation3] sm:$0xf] %vm350, %v353
      $region40: #{_bn_forward.1} parent=31 // pred_fallthru
        _
      %p355 = scmp.eq.s32.totalorder %s23, 1
      %p356 = pnand %p355, %p294
      %p357 = pneg %p356
      // Predicated region
      $region41: #{_bn_forward.1} parent=31 // pred_check
        _
      $region42: #{_bn_forward.1} parent=31 // pred_check_branch
        %359 = sbr.rel (%p356) target = $region44
      $region43: #{_bn_forward.1} parent=31 // pred_region
        %v360 = vld [vmem:[#allocation2] sm:$0xf]
        %v361 = vmul.f32 %v360, 0.001953125
        %v362 = vld [vmem:[#allocation3] sm:$0xf]
        %v363 = vmul.f32 %v361, 512.0
        %v364 = vmul.f32 %v363, %v361
        %v365 = vsub.f32 %v362, %v364
        %v366 = vrcp.pop 511.0
        %v367 = vmul.f32 %v365, %v366
        %v368 = vld [vmem:[%s1] sm:$0xf]
        %v369 = vadd.f32 %v367, 1e-05
        %v370 = vrsqrt.pop %v369
        %v371 = vmul.f32 %v368, %v370
        %v372 = vld [vmem:[%s2] sm:$0xf]
        %v373 = vmul.f32 %v361, %v371
        %v374 = vsub.f32 %v372, %v373
        %vm375 = vcmask 3072
        %376 = vst.msk [vmem:[#allocation4] sm:$0xf] %vm375, %v371
        %377 = vst.msk [vmem:[#allocation5] sm:$0xf] %vm375, %v374
        %378 = vst.msk [vmem:[%s4] sm:$0xf] %vm375, %v371
        %379 = vst.msk [vmem:[%s5] sm:$0xf] %vm375, %v374
        %380 = vst.msk [vmem:[%s6] sm:$0xf] %vm375, %v361
        %381 = vst.msk [vmem:[%s7] sm:$0xf] %vm375, %v367
      $region44: #{_bn_forward.1} parent=31 // pred_fallthru
        _
      // Predicated region
      $region45: #{_bn_forward.1} parent=31 // pred_check
        %p382 = pneg %p355
      $region46: #{_bn_forward.1} parent=31 // pred_check_branch
        %384 = sbr.rel (%p382) target = $region48
      $region47: #{_bn_forward.1} parent=31 // pred_region
        %v385 = vld [vmem:[%s282] sm:$0xff]
        %v386 = vld [vmem:[%s282 + $0x8] sm:$0xff]
        %v387 = vld [vmem:[#allocation4] sm:$0xf]
        %389 = vset.pattern.permute.xlu0 0
        %390 = vperm.xlu0 %389, %v387
        %v391 = vpop.permute.xlu0 %390
        %v393 = vunpack.c.l.s4 839922192
        %v394 = vunpack.c.0.s8 %v393
        %v395 = vlaneseq
        %v396 = vshrl.u32 %v395, 7
        %v397 = vsub.s32 %v394, %v396
        %v398 = vrot.slane %v391, %v397
        %v400 = vmul.f32 %v385, %v398
        %v401 = vmul.f32 %v386, %v398
        %v402 = vld [vmem:[#allocation5] sm:$0xf]
        %404 = vset.pattern.permute.xlu0 0
        %405 = vperm.xlu0 %404, %v402
        %v406 = vpop.permute.xlu0 %405
        %v408 = vunpack.c.l.s4 839922192
        %v409 = vunpack.c.0.s8 %v408
        %v410 = vlaneseq
        %v411 = vshrl.u32 %v410, 7
        %v412 = vsub.s32 %v409, %v411
        %v413 = vrot.slane %v406, %v412
        %v415 = vadd.f32 %v400, %v413
        %v416 = vadd.f32 %v401, %v413
        %417 = vst [vmem:[%s290] sm:$0xff] %v415
        %418 = vst [vmem:[%s290 + $0x8] sm:$0xff] %v416
      $region48: #{_bn_forward.1} parent=31 // pred_fallthru
        _
      %s419 = smul.u32 %s23, %s24
      %s420 = smul.u32 2, %s419
      %p421 = scmp.lt.s32.totalorder %s420, 1
      %s422 = scalar_select %p421, %s420, 1
      %s423 = smul.addr %s422, 2
      %s424 = smul.addr %s423, 4
      %s425 = scalar_lea.vmem %s3, %s424
      // Predicated region
      $region49: #{_bn_forward.1} parent=31 // pred_check
        %p426 = pneg %p119
      $region50: #{_bn_forward.1} parent=31 // pred_check_branch
        %428 = sbr.rel (%p426) target = $region52
      $region51: #{_bn_forward.1} parent=31 // pred_region
        %s429 = smul.u32 %s23, %s24
        %s430 = smul.u32 2, %s429
      $region52: #{_bn_forward.1} parent=31 // pred_fallthru
        _
      // Predicated region
      $region53: #{_bn_forward.1} parent=31 // pred_check
        %p431 = pneg %p140
      $region54: #{_bn_forward.1} parent=31 // pred_check_branch
        %433 = sbr.rel (%p431) target = $region56
      $region55: #{_bn_forward.1} parent=31 // pred_region
        _
      $region56: #{_bn_forward.1} parent=31 // pred_fallthru
        _
      // Predicated region
      $region57: #{_bn_forward.1} parent=31 // pred_check
        %p434 = pneg %p161
      $region58: #{_bn_forward.1} parent=31 // pred_check_branch
        %436 = sbr.rel (%p434) target = $region60
      $region59: #{_bn_forward.1} parent=31 // pred_region
        _
      $region60: #{_bn_forward.1} parent=31 // pred_fallthru
        _
      // Predicated region
      $region61: #{_bn_forward.1} parent=31 // pred_check
        %p437 = pneg %p182
      $region62: #{_bn_forward.1} parent=31 // pred_check_branch
        %439 = sbr.rel (%p437) target = $region64
      $region63: #{_bn_forward.1} parent=31 // pred_region
        _
      $region64: #{_bn_forward.1} parent=31 // pred_fallthru
        _
      // Predicated region
      $region65: #{_bn_forward.1} parent=31 // pred_check
        %p440 = pneg %p203
      $region66: #{_bn_forward.1} parent=31 // pred_check_branch
        %442 = sbr.rel (%p440) target = $region68
      $region67: #{_bn_forward.1} parent=31 // pred_region
        _
      $region68: #{_bn_forward.1} parent=31 // pred_fallthru
        _
      // Predicated region
      $region69: #{_bn_forward.1} parent=31 // pred_check
        %p443 = pneg %p140
      $region70: #{_bn_forward.1} parent=31 // pred_check_branch
        %445 = sbr.rel (%p443) target = $region72
      $region71: #{_bn_forward.1} parent=31 // pred_region
        _
      $region72: #{_bn_forward.1} parent=31 // pred_fallthru
        _
      // Predicated region
      $region73: #{_bn_forward.1} parent=31 // pred_check
        %p446 = pneg %p161
      $region74: #{_bn_forward.1} parent=31 // pred_check_branch
        %448 = sbr.rel (%p446) target = $region76
      $region75: #{_bn_forward.1} parent=31 // pred_region
        _
      $region76: #{_bn_forward.1} parent=31 // pred_fallthru
        _
      // Predicated region
      $region77: #{_bn_forward.1} parent=31 // pred_check
        %p449 = pneg %p182
      $region78: #{_bn_forward.1} parent=31 // pred_check_branch
        %451 = sbr.rel (%p449) target = $region80
      $region79: #{_bn_forward.1} parent=31 // pred_region
        _
      $region80: #{_bn_forward.1} parent=31 // pred_fallthru
        _
      // Predicated region
      $region81: #{_bn_forward.1} parent=31 // pred_check
        %p452 = pneg %p203
      $region82: #{_bn_forward.1} parent=31 // pred_check_branch
        %454 = sbr.rel (%p452) target = $region84
      $region83: #{_bn_forward.1} parent=31 // pred_region
        _
      $region84: #{_bn_forward.1} parent=31 // pred_fallthru
        _
    $region32: #{_bn_forward.1} parent=5 // pred_fallthru
      _
    %p455 = scmp.le.s32.totalorder 2, %s14
    // Predicated region
    $region85: #{_bn_forward.1} parent=5 // pred_check
      %p456 = pneg %p455
    $region86: #{_bn_forward.1} parent=5 // pred_check_branch
      %458 = sbr.rel (%p456) target = $region88
    $region87: #{_bn_forward.1} parent=5 // pred_region
      %s459 = ssub.s32 %s14, 2
      // Predicated region
      $region89: #{_bn_forward.1} parent=87 // pred_check
        %p460 = pneg %p125
      $region90: #{_bn_forward.1} parent=87 // pred_check_branch
        %462 = sbr.rel (%p460) target = $region92
      $region91: #{_bn_forward.1} parent=87 // pred_region
        %s463 = smul.u32 %s25, %s26
        %s464 = smul.u32 2, %s463
        %p465 = scmp.lt.s32.totalorder %s464, 1
        %s466 = scalar_select %p465, %s464, 1
        %s467 = smul.addr %s466, 2
        %s468 = smul.addr %s467, 4
        %s469 = scalar_lea.vmem %s3, %s468
      $region92: #{_bn_forward.1} parent=87 // pred_fallthru
        _
    $region88: #{_bn_forward.1} parent=5 // pred_fallthru
      _
  $region6: #{_bn_forward.1} parent=0 // loop_footer
    %s18 = sadd.s32 1, %s14
  $region7: #{_bn_forward.1} parent=0 // loop_footer_branch
    %13 = sbr.rel target = $region3
  $region8: #{_bn_forward.1} parent=0 // loop_exit
    _

</llo_original>
